<compile_context>
chip_gen: v6e
topology: v6e:2x2x1
jax: 0.10.0
libtpu: 0.0.40
codegen_flags: <defaults>
</compile_context>

<pallas_src>
import math
import jax
import jax.numpy as jnp
from jax.experimental import pallas as pl
from jax.experimental.pallas import tpu as pltpu

# ---- model config (small, consistent with the module's __init__) ----
BATCH      = 8
INPUT_DIM  = 16
HIDDEN     = 32
NUM_LAYERS = 2
NUM_HEADS  = 4          # head_dim = 8 (cancels out for seq_len == 1)
FFN        = HIDDEN * 4
EPS        = 1e-5
H = HIDDEN
OUT_LANES  = 128        # lane-dense output width; column 0 holds the result


def _layernorm_onepass(x, w, b):
    # one-pass LN: the two reductions are independent -> XLU can pipeline them
    m  = jnp.mean(x, axis=-1, keepdims=True)
    m2 = jnp.mean(x * x, axis=-1, keepdims=True)
    var = m2 - m * m
    return (x - m) * jax.lax.rsqrt(var + EPS) * w + b


def _layernorm_ref(x, w, b):
    mean = jnp.mean(x, axis=-1, keepdims=True)
    var = jnp.mean((x - mean) ** 2, axis=-1, keepdims=True)
    return (x - mean) * jax.lax.rsqrt(var + EPS) * w + b


# ---------------------------------------------------------------------------
# Parameter packing: weights row-stacked into two slabs (lane width 32 / 128).
# Matrices go first (row counts are multiples of 8); 1-row vectors are packed
# compactly afterwards (no per-entry sublane padding); only the slab total is
# padded to a multiple of 8 rows.  Every in-kernel view is a static slice.
# ---------------------------------------------------------------------------
class _SlabPacker:
    def __init__(self, width):
        self.width = width
        self.chunks = []
        self.offsets = {}          # name -> (row_start, rows)   (static ints)
        self.row = 0

    def add(self, name, arr):
        arr = jnp.asarray(arr, jnp.float32)
        r, c = arr.shape
        assert c <= self.width
        self.offsets[name] = (self.row, r)
        self.chunks.append(jnp.pad(arr, ((0, 0), (0, self.width - c))))
        self.row += r

    def finalize(self):
        slab = jnp.concatenate(self.chunks, axis=0)
        pad = (-slab.shape[0]) % 8
        if pad:
            slab = jnp.pad(slab, ((0, pad), (0, 0)))
        return slab


def make_params(key):
    """Deterministic synthetic parameters (transposed for h @ W layout)."""
    ks = jax.random.split(key, 20)
    s = 0.1
    p = {}
    p["emb_w"] = s * jax.random.normal(ks[0], (INPUT_DIM, H), jnp.float32)
    p["emb_b"] = s * jax.random.normal(ks[1], (1, H), jnp.float32)
    p["ipw"]  = s * jax.random.normal(ks[2], (NUM_LAYERS, H, 3 * H), jnp.float32)
    p["ipb"]  = s * jax.random.normal(ks[3], (NUM_LAYERS, 1, 3 * H), jnp.float32)
    p["opw"]  = s * jax.random.normal(ks[4], (NUM_LAYERS, H, H), jnp.float32)
    p["opb"]  = s * jax.random.normal(ks[5], (NUM_LAYERS, 1, H), jnp.float32)
    p["l1w"]  = s * jax.random.normal(ks[6], (NUM_LAYERS, H, FFN), jnp.float32)
    p["l1b"]  = s * jax.random.normal(ks[7], (NUM_LAYERS, 1, FFN), jnp.float32)
    p["l2w"]  = s * jax.random.normal(ks[8], (NUM_LAYERS, FFN, H), jnp.float32)
    p["l2b"]  = s * jax.random.normal(ks[9], (NUM_LAYERS, 1, H), jnp.float32)
    p["n1w"]  = jnp.ones((NUM_LAYERS, 1, H), jnp.float32)
    p["n1b"]  = jnp.zeros((NUM_LAYERS, 1, H), jnp.float32)
    p["n2w"]  = jnp.ones((NUM_LAYERS, 1, H), jnp.float32)
    p["n2b"]  = jnp.zeros((NUM_LAYERS, 1, H), jnp.float32)
    p["fcw"]  = s * jax.random.normal(ks[10], (H, 1), jnp.float32)
    p["fcb"]  = s * jax.random.normal(ks[11], (1, 1), jnp.float32)
    return p


def pack_params(p):
    # attention fold (exact for seq_len == 1):
    #   attn(h) = (h @ Wv + bv) @ Wo + bo = h @ (Wv@Wo) + (bv@Wo + bo)
    attn_w = jnp.einsum("lhv,lvo->lho", p["ipw"][:, :, 2 * H:3 * H], p["opw"])
    attn_b = jnp.einsum("lbv,lvo->lbo", p["ipb"][:, :, 2 * H:3 * H], p["opw"]) \
             + p["opb"]
    # residual fold:  h + attn(h) = h @ (I + Wv@Wo) + attn_b
    res_w = attn_w + jnp.eye(H, dtype=jnp.float32)[None]           # (L, H, H)

    # layer 0 additionally composed with the embedding Linear:
    #   (x@We + be)@(I+A0) + b0 = x @ (We@(I+A0)) + (be@(I+A0) + b0)
    w0 = p["emb_w"] @ res_w[0]                                     # (input_dim, H)
    b0 = p["emb_b"] @ res_w[0] + attn_b[0]                         # (1, H)

    s32 = _SlabPacker(H)
    # matrices (row counts already multiples of 8)
    s32.add("w0", w0)
    for l in range(1, NUM_LAYERS):
        s32.add(f"aw{l}", res_w[l])
    for l in range(NUM_LAYERS):
        s32.add(f"l2w{l}", p["l2w"][l])
    # 1-row vectors, packed compactly
    s32.add("ab0", b0)
    for l in range(1, NUM_LAYERS):
        s32.add(f"ab{l}", attn_b[l])
    for l in range(NUM_LAYERS):
        s32.add(f"l2b{l}", p["l2b"][l])
        s32.add(f"n1w{l}", p["n1w"][l])
        s32.add(f"n1b{l}", p["n1b"][l])
        s32.add(f"n2w{l}", p["n2w"][l])
        s32.add(f"n2b{l}", p["n2b"][l])
    s32.add("fc_w", p["fcw"].T)                                    # (1, H) row

    s128 = _SlabPacker(FFN)
    for l in range(NUM_LAYERS):
        s128.add(f"l1w{l}", p["l1w"][l])
    for l in range(NUM_LAYERS):
        s128.add(f"l1b{l}", p["l1b"][l])

    fc_b = jnp.asarray(p["fcb"], jnp.float32).reshape(1, 1)        # SMEM scalar
    return s32.finalize(), s128.finalize(), fc_b, s32.offsets, s128.offsets


# ---------------------------------------------------------------------------
# Kernel
# ---------------------------------------------------------------------------
def build_kernel(off32, off128):
    def kernel(x_ref, w32_ref, w128_ref, fcb_ref, out_ref):
        def g32(name):
            r0, r = off32[name]                   # static ints -> free view
            return w32_ref[r0:r0 + r, :]

        def g128(name):
            r0, r = off128[name]
            return w128_ref[r0:r0 + r, :]

        def encoder_layer(h, aw, ab, l):
            # attention + residual folded into ONE (·,H) matmul
            h = jnp.dot(h, aw, preferred_element_type=jnp.float32) + ab
            h = _layernorm_onepass(h, g32(f"n1w{l}"), g32(f"n1b{l}"))
            # feed forward: Linear -> ReLU -> Linear
            ff = jnp.dot(h, g128(f"l1w{l}"),
                         preferred_element_type=jnp.float32) + g128(f"l1b{l}")
            ff = jnp.maximum(ff, 0.0)
            ff = jnp.dot(ff, g32(f"l2w{l}"),
                         preferred_element_type=jnp.float32) + g32(f"l2b{l}")
            return _layernorm_onepass(h + ff, g32(f"n2w{l}"), g32(f"n2b{l}"))

        x = x_ref[...]                                             # (B, input_dim)

        # layer 0: embedding + attention + residual fused into one matmul
        h = encoder_layer(x, g32("w0"), g32("ab0"), 0)
        for l in range(1, NUM_LAYERS):                             # static unroll
            h = encoder_layer(h, g32(f"aw{l}"), g32(f"ab{l}"), l)

        # final fc (hidden -> 1): VPU multiply + lane reduce, lane-dense store;
        # bias added as an SMEM scalar.
        s = jnp.sum(h * g32("fc_w"), axis=-1, keepdims=True)       # (B, 1)
        out_ref[...] = jnp.broadcast_to(s, (BATCH, OUT_LANES)) + fcb_ref[0, 0]

    return kernel


def make_forward(off32, off128):
    kernel = build_kernel(off32, off128)

    @jax.jit
    def forward(x, w32, w128, fc_b):
        out_full = pl.pallas_call(
            kernel,
            out_shape=jax.ShapeDtypeStruct((BATCH, OUT_LANES), jnp.float32),
            in_specs=[
                pl.BlockSpec(memory_space=pltpu.MemorySpace.VMEM),   # x
                pl.BlockSpec(memory_space=pltpu.MemorySpace.VMEM),   # 32-wide slab
                pl.BlockSpec(memory_space=pltpu.MemorySpace.VMEM),   # 128-wide slab
                pl.BlockSpec(memory_space=pltpu.MemorySpace.SMEM),   # fc bias scalar
            ],
            out_specs=pl.BlockSpec(memory_space=pltpu.MemorySpace.VMEM),
        )(x, w32, w128, fc_b)
        return out_full[:, :1]                                     # (B, 1)

    return forward
    # TODO(synk): for large batches, add a batch-tile grid axis (M tile 128 on
    # v5e, 256 on v6e/v7x), keep the weight slabs block-0-resident
    # (index_map -> (0, 0)), and mark the batch axis "parallel" so v7x's second
    # TensorCore is used; optionally hoist the ~100 KB weight DMA out of the
    # per-call path via a cross-pallas_call prefetch.


# ---------------------------------------------------------------------------
# Plain-JAX reference with FULL multi-head attention (validates that the
# seq_len==1 / residual / embedding folds in the kernel are exact).
# ---------------------------------------------------------------------------
def reference_forward(x, p):
    h = x @ p["emb_w"] + p["emb_b"]                                # (B, H)
    B = h.shape[0]
    hd = H // NUM_HEADS
    for l in range(NUM_LAYERS):
        qkv = h @ p["ipw"][l] + p["ipb"][l]                        # (B, 3H)
        q, k, v = qkv[:, :H], qkv[:, H:2 * H], qkv[:, 2 * H:3 * H]
        qh = q.reshape(B, 1, NUM_HEADS, hd).transpose(0, 2, 1, 3)  # (B, nh, 1, hd)
        kh = k.reshape(B, 1, NUM_HEADS, hd).transpose(0, 2, 1, 3)
        vh = v.reshape(B, 1, NUM_HEADS, hd).transpose(0, 2, 1, 3)
        scores = qh @ kh.transpose(0, 1, 3, 2) / math.sqrt(hd)     # (B, nh, 1, 1)
        w = jax.nn.softmax(scores, axis=-1)                        # == 1 for S==1
        ctx = (w @ vh).transpose(0, 2, 1, 3).reshape(B, H)
        attn = ctx @ p["opw"][l] + p["opb"][l]
        h = _layernorm_ref(h + attn, p["n1w"][l], p["n1b"][l])
        ff = jnp.maximum(h @ p["l1w"][l] + p["l1b"][l], 0.0)
        ff = ff @ p["l2w"][l] + p["l2b"][l]
        h = _layernorm_ref(h + ff, p["n2w"][l], p["n2b"][l])
    return h @ p["fcw"] + p["fcb"]


if __name__ == "__main__":
    key = jax.random.PRNGKey(0)
    kx, kp = jax.random.split(key)
    params = make_params(kp)
    x = jax.random.normal(kx, (BATCH, INPUT_DIM), jnp.float32)

    w32, w128, fc_b, off32, off128 = pack_params(params)   # one-time, outside jit
    forward = make_forward(off32, off128)

    y = jax.block_until_ready(forward(x, w32, w128, fc_b))

    y_ref = reference_forward(x, params)
    assert y.shape == (BATCH, 1)
    assert jnp.allclose(y, y_ref, atol=1e-4, rtol=1e-4), "mismatch vs reference"
    # TODO(synk): dropout layers are treated as identity (eval mode); no RNG path.
    print("KERNEL_OK")
</pallas_src>

<mosaic_0001>
module attributes {stable_mosaic.version = 11 : i64} {
  func.func @kernel(%arg0: memref<8x16xf32, #tpu.memory_space<vmem>>, %arg1: memref<320x32xf32, #tpu.memory_space<vmem>>, %arg2: memref<72x128xf32, #tpu.memory_space<vmem>>, %arg3: memref<1x1xf32, #tpu.memory_space<smem>>, %arg4: memref<8x128xf32, #tpu.memory_space<vmem>>) attributes {dimension_semantics = [], scalar_prefetch = 0 : i64, scratch_operands = 0 : i64, tpu.core_type = #tpu.core_type<tc>} {
    %c0 = arith.constant 0 : index
    %c0_0 = arith.constant 0 : index
    %0 = vector.load %arg0[%c0, %c0_0] : memref<8x16xf32, #tpu.memory_space<vmem>>, vector<8x16xf32>
    %c0_1 = arith.constant 0 : index
    %c0_2 = arith.constant 0 : index
    %1 = vector.load %arg1[%c0_1, %c0_2] : memref<320x32xf32, #tpu.memory_space<vmem>>, vector<16x32xf32>
    %c304 = arith.constant 304 : index
    %c0_3 = arith.constant 0 : index
    %2 = vector.load %arg1[%c304, %c0_3] : memref<320x32xf32, #tpu.memory_space<vmem>>, vector<1x32xf32>
    %cst = arith.constant dense<0.000000e+00> : vector<8x32xf32>
    %3 = tpu.matmul %0, %1, %cst {dimension_numbers = #tpu.dot_dimension_numbers<[1], [0], [0], [1], [0, 0, 1, 1], [], []>} : vector<8x16xf32>, vector<16x32xf32>, vector<8x32xf32> -> vector<8x32xf32>
    %4 = vector.broadcast %2 : vector<1x32xf32> to vector<8x32xf32>
    %5 = arith.addf %3, %4 : vector<8x32xf32>
    %c307 = arith.constant 307 : index
    %c0_4 = arith.constant 0 : index
    %6 = vector.load %arg1[%c307, %c0_4] : memref<320x32xf32, #tpu.memory_space<vmem>>, vector<1x32xf32>
    %c308 = arith.constant 308 : index
    %c0_5 = arith.constant 0 : index
    %7 = vector.load %arg1[%c308, %c0_5] : memref<320x32xf32, #tpu.memory_space<vmem>>, vector<1x32xf32>
    %cst_6 = arith.constant dense<0.000000e+00> : vector<8xf32>
    %8 = vector.multi_reduction <add>, %5, %cst_6 [1] : vector<8x32xf32> to vector<8xf32>
    %9 = vector.shape_cast %8 : vector<8xf32> to vector<8x1xf32>
    %cst_7 = arith.constant 3.200000e+01 : f32
    %10 = vector.broadcast %cst_7 : f32 to vector<8x1xf32>
    %11 = arith.divf %9, %10 : vector<8x1xf32>
    %12 = arith.mulf %5, %5 : vector<8x32xf32>
    %cst_8 = arith.constant dense<0.000000e+00> : vector<8xf32>
    %13 = vector.multi_reduction <add>, %12, %cst_8 [1] : vector<8x32xf32> to vector<8xf32>
    %14 = vector.shape_cast %13 : vector<8xf32> to vector<8x1xf32>
    %cst_9 = arith.constant 3.200000e+01 : f32
    %15 = vector.broadcast %cst_9 : f32 to vector<8x1xf32>
    %16 = arith.divf %14, %15 : vector<8x1xf32>
    %17 = arith.mulf %11, %11 : vector<8x1xf32>
    %18 = arith.subf %16, %17 : vector<8x1xf32>
    %19 = vector.broadcast %11 : vector<8x1xf32> to vector<8x32xf32>
    %20 = arith.subf %5, %19 : vector<8x32xf32>
    %cst_10 = arith.constant 9.99999974E-6 : f32
    %21 = vector.broadcast %cst_10 : f32 to vector<8x1xf32>
    %22 = arith.addf %18, %21 : vector<8x1xf32>
    %23 = math.rsqrt %22 : vector<8x1xf32>
    %24 = vector.broadcast %23 : vector<8x1xf32> to vector<8x32xf32>
    %25 = arith.mulf %20, %24 : vector<8x32xf32>
    %26 = vector.broadcast %6 : vector<1x32xf32> to vector<8x32xf32>
    %27 = arith.mulf %25, %26 : vector<8x32xf32>
    %28 = vector.broadcast %7 : vector<1x32xf32> to vector<8x32xf32>
    %29 = arith.addf %27, %28 : vector<8x32xf32>
    %c0_11 = arith.constant 0 : index
    %c0_12 = arith.constant 0 : index
    %30 = vector.load %arg2[%c0_11, %c0_12] : memref<72x128xf32, #tpu.memory_space<vmem>>, vector<32x128xf32>
    %cst_13 = arith.constant dense<0.000000e+00> : vector<8x128xf32>
    %31 = tpu.matmul %29, %30, %cst_13 {dimension_numbers = #tpu.dot_dimension_numbers<[1], [0], [0], [1], [0, 0, 1, 1], [], []>} : vector<8x32xf32>, vector<32x128xf32>, vector<8x128xf32> -> vector<8x128xf32>
    %c64 = arith.constant 64 : index
    %c0_14 = arith.constant 0 : index
    %32 = vector.load %arg2[%c64, %c0_14] : memref<72x128xf32, #tpu.memory_space<vmem>>, vector<1x128xf32>
    %33 = vector.broadcast %32 : vector<1x128xf32> to vector<8x128xf32>
    %34 = arith.addf %31, %33 : vector<8x128xf32>
    %cst_15 = arith.constant 0.000000e+00 : f32
    %35 = vector.broadcast %cst_15 : f32 to vector<8x128xf32>
    %36 = arith.maximumf %34, %35 : vector<8x128xf32>
    %c48 = arith.constant 48 : index
    %c0_16 = arith.constant 0 : index
    %37 = vector.load %arg1[%c48, %c0_16] : memref<320x32xf32, #tpu.memory_space<vmem>>, vector<128x32xf32>
    %cst_17 = arith.constant dense<0.000000e+00> : vector<8x32xf32>
    %38 = tpu.matmul %36, %37, %cst_17 {dimension_numbers = #tpu.dot_dimension_numbers<[1], [0], [0], [1], [0, 0, 1, 1], [], []>} : vector<8x128xf32>, vector<128x32xf32>, vector<8x32xf32> -> vector<8x32xf32>
    %c306 = arith.constant 306 : index
    %c0_18 = arith.constant 0 : index
    %39 = vector.load %arg1[%c306, %c0_18] : memref<320x32xf32, #tpu.memory_space<vmem>>, vector<1x32xf32>
    %40 = vector.broadcast %39 : vector<1x32xf32> to vector<8x32xf32>
    %41 = arith.addf %38, %40 : vector<8x32xf32>
    %42 = arith.addf %29, %41 : vector<8x32xf32>
    %c309 = arith.constant 309 : index
    %c0_19 = arith.constant 0 : index
    %43 = vector.load %arg1[%c309, %c0_19] : memref<320x32xf32, #tpu.memory_space<vmem>>, vector<1x32xf32>
    %c310 = arith.constant 310 : index
    %c0_20 = arith.constant 0 : index
    %44 = vector.load %arg1[%c310, %c0_20] : memref<320x32xf32, #tpu.memory_space<vmem>>, vector<1x32xf32>
    %cst_21 = arith.constant dense<0.000000e+00> : vector<8xf32>
    %45 = vector.multi_reduction <add>, %42, %cst_21 [1] : vector<8x32xf32> to vector<8xf32>
    %46 = vector.shape_cast %45 : vector<8xf32> to vector<8x1xf32>
    %cst_22 = arith.constant 3.200000e+01 : f32
    %47 = vector.broadcast %cst_22 : f32 to vector<8x1xf32>
    %48 = arith.divf %46, %47 : vector<8x1xf32>
    %49 = arith.mulf %42, %42 : vector<8x32xf32>
    %cst_23 = arith.constant dense<0.000000e+00> : vector<8xf32>
    %50 = vector.multi_reduction <add>, %49, %cst_23 [1] : vector<8x32xf32> to vector<8xf32>
    %51 = vector.shape_cast %50 : vector<8xf32> to vector<8x1xf32>
    %cst_24 = arith.constant 3.200000e+01 : f32
    %52 = vector.broadcast %cst_24 : f32 to vector<8x1xf32>
    %53 = arith.divf %51, %52 : vector<8x1xf32>
    %54 = arith.mulf %48, %48 : vector<8x1xf32>
    %55 = arith.subf %53, %54 : vector<8x1xf32>
    %56 = vector.broadcast %48 : vector<8x1xf32> to vector<8x32xf32>
    %57 = arith.subf %42, %56 : vector<8x32xf32>
    %cst_25 = arith.constant 9.99999974E-6 : f32
    %58 = vector.broadcast %cst_25 : f32 to vector<8x1xf32>
    %59 = arith.addf %55, %58 : vector<8x1xf32>
    %60 = math.rsqrt %59 : vector<8x1xf32>
    %61 = vector.broadcast %60 : vector<8x1xf32> to vector<8x32xf32>
    %62 = arith.mulf %57, %61 : vector<8x32xf32>
    %63 = vector.broadcast %43 : vector<1x32xf32> to vector<8x32xf32>
    %64 = arith.mulf %62, %63 : vector<8x32xf32>
    %65 = vector.broadcast %44 : vector<1x32xf32> to vector<8x32xf32>
    %66 = arith.addf %64, %65 : vector<8x32xf32>
    %c16 = arith.constant 16 : index
    %c0_26 = arith.constant 0 : index
    %67 = vector.load %arg1[%c16, %c0_26] : memref<320x32xf32, #tpu.memory_space<vmem>>, vector<32x32xf32>
    %c305 = arith.constant 305 : index
    %c0_27 = arith.constant 0 : index
    %68 = vector.load %arg1[%c305, %c0_27] : memref<320x32xf32, #tpu.memory_space<vmem>>, vector<1x32xf32>
    %cst_28 = arith.constant dense<0.000000e+00> : vector<8x32xf32>
    %69 = tpu.matmul %66, %67, %cst_28 {dimension_numbers = #tpu.dot_dimension_numbers<[1], [0], [0], [1], [0, 0, 1, 1], [], []>} : vector<8x32xf32>, vector<32x32xf32>, vector<8x32xf32> -> vector<8x32xf32>
    %70 = vector.broadcast %68 : vector<1x32xf32> to vector<8x32xf32>
    %71 = arith.addf %69, %70 : vector<8x32xf32>
    %c312 = arith.constant 312 : index
    %c0_29 = arith.constant 0 : index
    %72 = vector.load %arg1[%c312, %c0_29] : memref<320x32xf32, #tpu.memory_space<vmem>>, vector<1x32xf32>
    %c313 = arith.constant 313 : index
    %c0_30 = arith.constant 0 : index
    %73 = vector.load %arg1[%c313, %c0_30] : memref<320x32xf32, #tpu.memory_space<vmem>>, vector<1x32xf32>
    %cst_31 = arith.constant dense<0.000000e+00> : vector<8xf32>
    %74 = vector.multi_reduction <add>, %71, %cst_31 [1] : vector<8x32xf32> to vector<8xf32>
    %75 = vector.shape_cast %74 : vector<8xf32> to vector<8x1xf32>
    %cst_32 = arith.constant 3.200000e+01 : f32
    %76 = vector.broadcast %cst_32 : f32 to vector<8x1xf32>
    %77 = arith.divf %75, %76 : vector<8x1xf32>
    %78 = arith.mulf %71, %71 : vector<8x32xf32>
    %cst_33 = arith.constant dense<0.000000e+00> : vector<8xf32>
    %79 = vector.multi_reduction <add>, %78, %cst_33 [1] : vector<8x32xf32> to vector<8xf32>
    %80 = vector.shape_cast %79 : vector<8xf32> to vector<8x1xf32>
    %cst_34 = arith.constant 3.200000e+01 : f32
    %81 = vector.broadcast %cst_34 : f32 to vector<8x1xf32>
    %82 = arith.divf %80, %81 : vector<8x1xf32>
    %83 = arith.mulf %77, %77 : vector<8x1xf32>
    %84 = arith.subf %82, %83 : vector<8x1xf32>
    %85 = vector.broadcast %77 : vector<8x1xf32> to vector<8x32xf32>
    %86 = arith.subf %71, %85 : vector<8x32xf32>
    %cst_35 = arith.constant 9.99999974E-6 : f32
    %87 = vector.broadcast %cst_35 : f32 to vector<8x1xf32>
    %88 = arith.addf %84, %87 : vector<8x1xf32>
    %89 = math.rsqrt %88 : vector<8x1xf32>
    %90 = vector.broadcast %89 : vector<8x1xf32> to vector<8x32xf32>
    %91 = arith.mulf %86, %90 : vector<8x32xf32>
    %92 = vector.broadcast %72 : vector<1x32xf32> to vector<8x32xf32>
    %93 = arith.mulf %91, %92 : vector<8x32xf32>
    %94 = vector.broadcast %73 : vector<1x32xf32> to vector<8x32xf32>
    %95 = arith.addf %93, %94 : vector<8x32xf32>
    %c32 = arith.constant 32 : index
    %c0_36 = arith.constant 0 : index
    %96 = vector.load %arg2[%c32, %c0_36] : memref<72x128xf32, #tpu.memory_space<vmem>>, vector<32x128xf32>
    %cst_37 = arith.constant dense<0.000000e+00> : vector<8x128xf32>
    %97 = tpu.matmul %95, %96, %cst_37 {dimension_numbers = #tpu.dot_dimension_numbers<[1], [0], [0], [1], [0, 0, 1, 1], [], []>} : vector<8x32xf32>, vector<32x128xf32>, vector<8x128xf32> -> vector<8x128xf32>
    %c65 = arith.constant 65 : index
    %c0_38 = arith.constant 0 : index
    %98 = vector.load %arg2[%c65, %c0_38] : memref<72x128xf32, #tpu.memory_space<vmem>>, vector<1x128xf32>
    %99 = vector.broadcast %98 : vector<1x128xf32> to vector<8x128xf32>
    %100 = arith.addf %97, %99 : vector<8x128xf32>
    %cst_39 = arith.constant 0.000000e+00 : f32
    %101 = vector.broadcast %cst_39 : f32 to vector<8x128xf32>
    %102 = arith.maximumf %100, %101 : vector<8x128xf32>
    %c176 = arith.constant 176 : index
    %c0_40 = arith.constant 0 : index
    %103 = vector.load %arg1[%c176, %c0_40] : memref<320x32xf32, #tpu.memory_space<vmem>>, vector<128x32xf32>
    %cst_41 = arith.constant dense<0.000000e+00> : vector<8x32xf32>
    %104 = tpu.matmul %102, %103, %cst_41 {dimension_numbers = #tpu.dot_dimension_numbers<[1], [0], [0], [1], [0, 0, 1, 1], [], []>} : vector<8x128xf32>, vector<128x32xf32>, vector<8x32xf32> -> vector<8x32xf32>
    %c311 = arith.constant 311 : index
    %c0_42 = arith.constant 0 : index
    %105 = vector.load %arg1[%c311, %c0_42] : memref<320x32xf32, #tpu.memory_space<vmem>>, vector<1x32xf32>
    %106 = vector.broadcast %105 : vector<1x32xf32> to vector<8x32xf32>
    %107 = arith.addf %104, %106 : vector<8x32xf32>
    %108 = arith.addf %95, %107 : vector<8x32xf32>
    %c314 = arith.constant 314 : index
    %c0_43 = arith.constant 0 : index
    %109 = vector.load %arg1[%c314, %c0_43] : memref<320x32xf32, #tpu.memory_space<vmem>>, vector<1x32xf32>
    %c315 = arith.constant 315 : index
    %c0_44 = arith.constant 0 : index
    %110 = vector.load %arg1[%c315, %c0_44] : memref<320x32xf32, #tpu.memory_space<vmem>>, vector<1x32xf32>
    %cst_45 = arith.constant dense<0.000000e+00> : vector<8xf32>
    %111 = vector.multi_reduction <add>, %108, %cst_45 [1] : vector<8x32xf32> to vector<8xf32>
    %112 = vector.shape_cast %111 : vector<8xf32> to vector<8x1xf32>
    %cst_46 = arith.constant 3.200000e+01 : f32
    %113 = vector.broadcast %cst_46 : f32 to vector<8x1xf32>
    %114 = arith.divf %112, %113 : vector<8x1xf32>
    %115 = arith.mulf %108, %108 : vector<8x32xf32>
    %cst_47 = arith.constant dense<0.000000e+00> : vector<8xf32>
    %116 = vector.multi_reduction <add>, %115, %cst_47 [1] : vector<8x32xf32> to vector<8xf32>
    %117 = vector.shape_cast %116 : vector<8xf32> to vector<8x1xf32>
    %cst_48 = arith.constant 3.200000e+01 : f32
    %118 = vector.broadcast %cst_48 : f32 to vector<8x1xf32>
    %119 = arith.divf %117, %118 : vector<8x1xf32>
    %120 = arith.mulf %114, %114 : vector<8x1xf32>
    %121 = arith.subf %119, %120 : vector<8x1xf32>
    %122 = vector.broadcast %114 : vector<8x1xf32> to vector<8x32xf32>
    %123 = arith.subf %108, %122 : vector<8x32xf32>
    %cst_49 = arith.constant 9.99999974E-6 : f32
    %124 = vector.broadcast %cst_49 : f32 to vector<8x1xf32>
    %125 = arith.addf %121, %124 : vector<8x1xf32>
    %126 = math.rsqrt %125 : vector<8x1xf32>
    %127 = vector.broadcast %126 : vector<8x1xf32> to vector<8x32xf32>
    %128 = arith.mulf %123, %127 : vector<8x32xf32>
    %129 = vector.broadcast %109 : vector<1x32xf32> to vector<8x32xf32>
    %130 = arith.mulf %128, %129 : vector<8x32xf32>
    %131 = vector.broadcast %110 : vector<1x32xf32> to vector<8x32xf32>
    %132 = arith.addf %130, %131 : vector<8x32xf32>
    %c316 = arith.constant 316 : index
    %c0_50 = arith.constant 0 : index
    %133 = vector.load %arg1[%c316, %c0_50] : memref<320x32xf32, #tpu.memory_space<vmem>>, vector<1x32xf32>
    %134 = vector.broadcast %133 : vector<1x32xf32> to vector<8x32xf32>
    %135 = arith.mulf %132, %134 : vector<8x32xf32>
    %cst_51 = arith.constant dense<0.000000e+00> : vector<8xf32>
    %136 = vector.multi_reduction <add>, %135, %cst_51 [1] : vector<8x32xf32> to vector<8xf32>
    %137 = vector.shape_cast %136 : vector<8xf32> to vector<8x1xf32>
    %138 = vector.shape_cast %137 : vector<8x1xf32> to vector<8x1xf32>
    %139 = vector.broadcast %138 : vector<8x1xf32> to vector<8x128xf32>
    %c0_52 = arith.constant 0 : index
    %c0_53 = arith.constant 0 : index
    %140 = memref.load %arg3[%c0_52, %c0_53] : memref<1x1xf32, #tpu.memory_space<smem>>
    %141 = vector.broadcast %140 : f32 to vector<8x128xf32>
    %142 = arith.addf %139, %141 : vector<8x128xf32>
    %c0_54 = arith.constant 0 : index
    %c0_55 = arith.constant 0 : index
    %143 = vector.load %arg4[%c0_54, %c0_55] : memref<8x128xf32, #tpu.memory_space<vmem>>, vector<8x128xf32>
    tpu.vector_store %arg4[%c0_54, %c0_55], %142 {strides = array<i32>} : memref<8x128xf32, #tpu.memory_space<vmem>>, vector<8x128xf32>,
    return
  }
}

</mosaic_0001>

<llo_original>
// kernel: forward.1
$region0: #{forward.1}
  #allocation0 [shape = 'u32[]', space=smem, size = 0x4, offset = 0x4, fixed_abs, tag = 'smem constant byte address 0x4 - core index']
  #allocation1 [shape = 'u32[144,128]{1,0:T(1,128)}', space=vmem, size = 0x12000, scoped, tag = 'internal scratch']
  #allocation2 [shape = 'f32[1,1]{1,0:T(1,128)S(6)}', space=smem, size = 0x200, scoped, tag = 'scoped memory for forward.1']
  %s0 = inlined_call_operand.vmem [shape: f32[8,16], index: 0, kind: input, shape index: {}]
  %s1 = inlined_call_operand.vmem [shape: f32[320,32], index: 1, kind: input, shape index: {}]
  %s2 = inlined_call_operand.vmem [shape: f32[72,128], index: 2, kind: input, shape index: {}]
  %s3 = inlined_call_operand.<no memory space> [shape: f32[1,1], index: 3, kind: input, shape index: {}]
  %s4 = inlined_call_operand.vmem [shape: f32[8,128], index: 4, kind: output, shape index: {}]
  %s5 = sld [smem:[#allocation0]]
  $region26: #{forward.1} parent=0
    _
  %s7 = ssub.s32 1, %s5
  %s8 = scalar_select 0, %s7, %s5
  %9 = sst [smem:[#allocation2]] %s3
  // Predicated region
  $region2: #{forward.1} parent=0 // pred_check
    _
  $region3: #{forward.1} parent=0 // pred_check_branch
    %11 = sbr.rel (0) target = $region5
  $region4: #{forward.1} parent=0 // pred_region
    _
  $region5: #{forward.1} parent=0 // pred_fallthru
    _
  // Predicated region
  $region6: #{forward.1} parent=0 // pred_check
    _
  $region7: #{forward.1} parent=0 // pred_check_branch
    %13 = sbr.rel (0) target = $region9
  $region8: #{forward.1} parent=0 // pred_region
    _
  $region9: #{forward.1} parent=0 // pred_fallthru
    _
  // Predicated region
  $region10: #{forward.1} parent=0 // pred_check
    _
  $region11: #{forward.1} parent=0 // pred_check_branch
    %15 = sbr.rel (0) target = $region13
  $region12: #{forward.1} parent=0 // pred_region
    _
  $region13: #{forward.1} parent=0 // pred_fallthru
    _
  // Predicated region
  $region14: #{forward.1} parent=0 // pred_check
    _
  $region15: #{forward.1} parent=0 // pred_check_branch
    %17 = sbr.rel (0) target = $region17
  $region16: #{forward.1} parent=0 // pred_region
    _
  $region17: #{forward.1} parent=0 // pred_fallthru
    _
  %v18 = vld [vmem:[%s0] sm:$0xff]
  %v19 = vld [vmem:[%s1] sm:$0xff]
  %v20 = vld [vmem:[%s1 + $0x8] sm:$0xff]
  %v21 = vld [vmem:[%s1 + $0x130] sm:$0x1]
  %v22 = vlaneseq
  %v23 = vshrl.u32 %v22, 7
  %v24 = vsub.s32 0, %v23
  %v25 = vrot.slane %v21, %v24
  %vm26 = vcmask 130048
  %v28 = vsel %vm26, %v18, 0
  %30 = vmatprep.subr.mxu0 0.0
  %31 = vmatpush1.msra.mxu0 0.0
  %32 = vmatprep.subr.mxu0 0.0
  %33 = vmatpush1.msra.mxu0 0.0
  %34 = vmatprep.subr.mxu0 0.0
  %35 = vmatpush1.msra.mxu0 0.0
  %36 = vmatprep.subr.mxu0 0.0
  %37 = vmatpush1.msra.mxu0 0.0
  %38 = vmatprep.subr.mxu0 0.0
  %39 = vmatpush1.msra.mxu0 0.0
  %40 = vmatprep.subr.mxu0 0.0
  %41 = vmatpush1.msra.mxu0 0.0
  %42 = vmatprep.subr.mxu0 0.0
  %43 = vmatpush1.msra.mxu0 0.0
  %44 = vmatprep.subr.mxu0 0.0
  %45 = vmatpush1.msra.mxu0 0.0
  %46 = vmatprep.subr.mxu0 0.0
  %47 = vmatpush1.msra.mxu0 0.0
  %48 = vmatprep.subr.mxu0 0.0
  %49 = vmatpush1.msra.mxu0 0.0
  %50 = vmatprep.subr.mxu0 0.0
  %51 = vmatpush1.msra.mxu0 0.0
  %52 = vmatprep.subr.mxu0 0.0
  %53 = vmatpush1.msra.mxu0 0.0
  %54 = vmatprep.subr.mxu0 0.0
  %55 = vmatpush1.msra.mxu0 0.0
  %56 = vmatprep.subr.mxu0 0.0
  %57 = vmatpush1.msra.mxu0 0.0
  %58 = vmatprep.subr.mxu0 0.0
  %59 = vmatpush1.msra.mxu0 %v20
  %60 = vmatprep.subr.mxu0 0.0
  %61 = vmatpush1.msra.mxu0 %v19
  %62 = vmatprep.subr.mxu0 0.0
  %63 = vmatpush2.msra.mxu0 0.0
  %64 = vmatprep.subr.mxu0 0.0
  %65 = vmatpush2.msra.mxu0 0.0
  %66 = vmatprep.subr.mxu0 0.0
  %67 = vmatpush2.msra.mxu0 0.0
  %68 = vmatprep.subr.mxu0 0.0
  %69 = vmatpush2.msra.mxu0 0.0
  %70 = vmatprep.subr.mxu0 0.0
  %71 = vmatpush2.msra.mxu0 0.0
  %72 = vmatprep.subr.mxu0 0.0
  %73 = vmatpush2.msra.mxu0 0.0
  %74 = vmatprep.subr.mxu0 0.0
  %75 = vmatpush2.msra.mxu0 0.0
  %76 = vmatprep.subr.mxu0 0.0
  %77 = vmatpush2.msra.mxu0 0.0
  %78 = vmatprep.subr.mxu0 0.0
  %79 = vmatpush2.msra.mxu0 0.0
  %80 = vmatprep.subr.mxu0 0.0
  %81 = vmatpush2.msra.mxu0 0.0
  %82 = vmatprep.subr.mxu0 0.0
  %83 = vmatpush2.msra.mxu0 0.0
  %84 = vmatprep.subr.mxu0 0.0
  %85 = vmatpush2.msra.mxu0 0.0
  %86 = vmatprep.subr.mxu0 0.0
  %87 = vmatpush2.msra.mxu0 0.0
  %88 = vmatprep.subr.mxu0 0.0
  %89 = vmatpush2.msra.mxu0 0.0
  %90 = vmatprep.subr.mxu0 0.0
  %91 = vmatpush2.msra.mxu0 0.0
  %92 = vmatprep.subr.mxu0 0.0
  %93 = vmatpush2.msra.mxu0 0.0
  %94 = vmatprep.mubr.f32.mxu0 0.0
  %95 = vmatmul.mubr.f32.gmra.mxu0 %v28
  %v96 = vpop.f32.mrf.mxu0
  %v97 = vadd.f32 %v25, %v96
  %v98 = vpop.f32.mrf.mxu0
  %99 = vdwg.mxu0
  %v100 = vld [vmem:[%s1 + $0x133] sm:$0x1]
  %v101 = vld [vmem:[%s1 + $0x134] sm:$0x1]
  %vm102 = vcmask 261120
  %v103 = vsel %vm102, %v97, 0.0
  %104 = vadd.xlane.f32.xlu0 %v103
  %v105 = vpop.xlane.xlu0 %104
  %v106 = vrcp.pop 32.0
  %v107 = vmul.f32 %v105, %v106
  %v108 = vmul.f32 %v97, %v97
  %v109 = vsel %vm102, %v108, 0.0
  %110 = vadd.xlane.f32.xlu0 %v109
  %v111 = vpop.xlane.xlu0 %110
  %v112 = vmul.f32 %v111, %v106
  %v113 = vmul.f32 %v107, %v107
  %v114 = vsub.f32 %v112, %v113
  %v115 = vsub.f32 %v97, %v107
  %v116 = vadd.f32 %v114, 1e-05
  %v117 = vrsqrt.pop %v116
  %v118 = vmul.f32 %v115, %v117
  %v119 = vlaneseq
  %v120 = vshrl.u32 %v119, 7
  %v121 = vsub.s32 0, %v120
  %v122 = vrot.slane %v100, %v121
  %v123 = vmul.f32 %v118, %v122
  %v124 = vlaneseq
  %v125 = vshrl.u32 %v124, 7
  %v126 = vsub.s32 0, %v125
  %v127 = vrot.slane %v101, %v126
  %v128 = vadd.f32 %v123, %v127
  %v129 = vld [vmem:[%s2] sm:$0xff]
  %v130 = vld [vmem:[%s2 + $0x8] sm:$0xff]
  %v131 = vld [vmem:[%s2 + $0x10] sm:$0xff]
  %v132 = vld [vmem:[%s2 + $0x18] sm:$0xff]
  %v133 = vld [vmem:[%s2 + $0x40] sm:$0x1]
  %v134 = vlaneseq
  %v135 = vshrl.u32 %v134, 7
  %v136 = vsub.s32 0, %v135
  %v137 = vrot.slane %v133, %v136
  %v139 = vsel %vm102, %v128, 0
  %141 = vmatprep.subr.mxu0 0.0
  %142 = vmatpush1.msra.mxu0 0.0
  %143 = vmatprep.subr.mxu0 0.0
  %144 = vmatpush1.msra.mxu0 0.0
  %145 = vmatprep.subr.mxu0 0.0
  %146 = vmatpush1.msra.mxu0 0.0
  %147 = vmatprep.subr.mxu0 0.0
  %148 = vmatpush1.msra.mxu0 0.0
  %149 = vmatprep.subr.mxu0 0.0
  %150 = vmatpush1.msra.mxu0 0.0
  %151 = vmatprep.subr.mxu0 0.0
  %152 = vmatpush1.msra.mxu0 0.0
  %153 = vmatprep.subr.mxu0 0.0
  %154 = vmatpush1.msra.mxu0 0.0
  %155 = vmatprep.subr.mxu0 0.0
  %156 = vmatpush1.msra.mxu0 0.0
  %157 = vmatprep.subr.mxu0 0.0
  %158 = vmatpush1.msra.mxu0 0.0
  %159 = vmatprep.subr.mxu0 0.0
  %160 = vmatpush1.msra.mxu0 0.0
  %161 = vmatprep.subr.mxu0 0.0
  %162 = vmatpush1.msra.mxu0 0.0
  %163 = vmatprep.subr.mxu0 0.0
  %164 = vmatpush1.msra.mxu0 0.0
  %165 = vmatprep.subr.mxu0 0.0
  %166 = vmatpush1.msra.mxu0 %v132
  %167 = vmatprep.subr.mxu0 0.0
  %168 = vmatpush1.msra.mxu0 %v131
  %169 = vmatprep.subr.mxu0 0.0
  %170 = vmatpush1.msra.mxu0 %v130
  %171 = vmatprep.subr.mxu0 0.0
  %172 = vmatpush1.msra.mxu0 %v129
  %173 = vmatprep.subr.mxu0 0.0
  %174 = vmatpush2.msra.mxu0 0.0
  %175 = vmatprep.subr.mxu0 0.0
  %176 = vmatpush2.msra.mxu0 0.0
  %177 = vmatprep.subr.mxu0 0.0
  %178 = vmatpush2.msra.mxu0 0.0
  %179 = vmatprep.subr.mxu0 0.0
  %180 = vmatpush2.msra.mxu0 0.0
  %181 = vmatprep.subr.mxu0 0.0
  %182 = vmatpush2.msra.mxu0 0.0
  %183 = vmatprep.subr.mxu0 0.0
  %184 = vmatpush2.msra.mxu0 0.0
  %185 = vmatprep.subr.mxu0 0.0
  %186 = vmatpush2.msra.mxu0 0.0
  %187 = vmatprep.subr.mxu0 0.0
  %188 = vmatpush2.msra.mxu0 0.0
  %189 = vmatprep.subr.mxu0 0.0
  %190 = vmatpush2.msra.mxu0 0.0
  %191 = vmatprep.subr.mxu0 0.0
  %192 = vmatpush2.msra.mxu0 0.0
  %193 = vmatprep.subr.mxu0 0.0
  %194 = vmatpush2.msra.mxu0 0.0
  %195 = vmatprep.subr.mxu0 0.0
  %196 = vmatpush2.msra.mxu0 0.0
  %197 = vmatprep.subr.mxu0 0.0
  %198 = vmatpush2.msra.mxu0 0.0
  %199 = vmatprep.subr.mxu0 0.0
  %200 = vmatpush2.msra.mxu0 0.0
  %201 = vmatprep.subr.mxu0 0.0
  %202 = vmatpush2.msra.mxu0 0.0
  %203 = vmatprep.subr.mxu0 0.0
  %204 = vmatpush2.msra.mxu0 0.0
  %205 = vmatprep.mubr.f32.mxu0 0.0
  %206 = vmatmul.mubr.f32.gmra.mxu0 %v139
  %v207 = vpop.f32.mrf.mxu0
  %v208 = vadd.f32 %v137, %v207
  %v209 = vpop.f32.mrf.mxu0
  %210 = vdwg.mxu0
  %v211 = vmax.f32 %v208, 0.0
  %v212 = vld [vmem:[%s1 + $0x30] sm:$0xff]
  %v213 = vld [vmem:[%s1 + $0x38] sm:$0xff]
  %v214 = vld [vmem:[%s1 + $0x40] sm:$0xff]
  %v215 = vld [vmem:[%s1 + $0x48] sm:$0xff]
  %v216 = vld [vmem:[%s1 + $0x50] sm:$0xff]
  %v217 = vld [vmem:[%s1 + $0x58] sm:$0xff]
  %v218 = vld [vmem:[%s1 + $0x60] sm:$0xff]
  %v219 = vld [vmem:[%s1 + $0x68] sm:$0xff]
  %v220 = vld [vmem:[%s1 + $0x70] sm:$0xff]
  %v221 = vld [vmem:[%s1 + $0x78] sm:$0xff]
  %v222 = vld [vmem:[%s1 + $0x80] sm:$0xff]
  %v223 = vld [vmem:[%s1 + $0x88] sm:$0xff]
  %v224 = vld [vmem:[%s1 + $0x90] sm:$0xff]
  %v225 = vld [vmem:[%s1 + $0x98] sm:$0xff]
  %v226 = vld [vmem:[%s1 + $0xa0] sm:$0xff]
  %v227 = vld [vmem:[%s1 + $0xa8] sm:$0xff]
  %v228 = vld [vmem:[%s1 + $0x132] sm:$0x1]
  %v229 = vlaneseq
  %v230 = vshrl.u32 %v229, 7
  %v231 = vsub.s32 0, %v230
  %v232 = vrot.slane %v228, %v231
  %233 = vmatprep.subr.mxu0 0.0
  %234 = vmatpush1.msra.mxu0 %v227
  %235 = vmatprep.subr.mxu0 0.0
  %236 = vmatpush1.msra.mxu0 %v226
  %237 = vmatprep.subr.mxu0 0.0
  %238 = vmatpush1.msra.mxu0 %v225
  %239 = vmatprep.subr.mxu0 0.0
  %240 = vmatpush1.msra.mxu0 %v224
  %241 = vmatprep.subr.mxu0 0.0
  %242 = vmatpush1.msra.mxu0 %v223
  %243 = vmatprep.subr.mxu0 0.0
  %244 = vmatpush1.msra.mxu0 %v222
  %245 = vmatprep.subr.mxu0 0.0
  %246 = vmatpush1.msra.mxu0 %v221
  %247 = vmatprep.subr.mxu0 0.0
  %248 = vmatpush1.msra.mxu0 %v220
  %249 = vmatprep.subr.mxu0 0.0
  %250 = vmatpush1.msra.mxu0 %v219
  %251 = vmatprep.subr.mxu0 0.0
  %252 = vmatpush1.msra.mxu0 %v218
  %253 = vmatprep.subr.mxu0 0.0
  %254 = vmatpush1.msra.mxu0 %v217
  %255 = vmatprep.subr.mxu0 0.0
  %256 = vmatpush1.msra.mxu0 %v216
  %257 = vmatprep.subr.mxu0 0.0
  %258 = vmatpush1.msra.mxu0 %v215
  %259 = vmatprep.subr.mxu0 0.0
  %260 = vmatpush1.msra.mxu0 %v214
  %261 = vmatprep.subr.mxu0 0.0
  %262 = vmatpush1.msra.mxu0 %v213
  %263 = vmatprep.subr.mxu0 0.0
  %264 = vmatpush1.msra.mxu0 %v212
  %265 = vmatprep.subr.mxu0 0.0
  %266 = vmatpush2.msra.mxu0 0.0
  %267 = vmatprep.subr.mxu0 0.0
  %268 = vmatpush2.msra.mxu0 0.0
  %269 = vmatprep.subr.mxu0 0.0
  %270 = vmatpush2.msra.mxu0 0.0
  %271 = vmatprep.subr.mxu0 0.0
  %272 = vmatpush2.msra.mxu0 0.0
  %273 = vmatprep.subr.mxu0 0.0
  %274 = vmatpush2.msra.mxu0 0.0
  %275 = vmatprep.subr.mxu0 0.0
  %276 = vmatpush2.msra.mxu0 0.0
  %277 = vmatprep.subr.mxu0 0.0
  %278 = vmatpush2.msra.mxu0 0.0
  %279 = vmatprep.subr.mxu0 0.0
  %280 = vmatpush2.msra.mxu0 0.0
  %281 = vmatprep.subr.mxu0 0.0
  %282 = vmatpush2.msra.mxu0 0.0
  %283 = vmatprep.subr.mxu0 0.0
  %284 = vmatpush2.msra.mxu0 0.0
  %285 = vmatprep.subr.mxu0 0.0
  %286 = vmatpush2.msra.mxu0 0.0
  %287 = vmatprep.subr.mxu0 0.0
  %288 = vmatpush2.msra.mxu0 0.0
  %289 = vmatprep.subr.mxu0 0.0
  %290 = vmatpush2.msra.mxu0 0.0
  %291 = vmatprep.subr.mxu0 0.0
  %292 = vmatpush2.msra.mxu0 0.0
  %293 = vmatprep.subr.mxu0 0.0
  %294 = vmatpush2.msra.mxu0 0.0
  %295 = vmatprep.subr.mxu0 0.0
  %296 = vmatpush2.msra.mxu0 0.0
  %297 = vmatprep.mubr.f32.mxu0 0.0
  %298 = vmatmul.mubr.f32.gmra.mxu0 %v211
  %v299 = vpop.f32.mrf.mxu0
  %v300 = vadd.f32 %v232, %v299
  %v301 = vpop.f32.mrf.mxu0
  %302 = vdwg.mxu0
  %v303 = vadd.f32 %v128, %v300
  %v304 = vld [vmem:[%s1 + $0x135] sm:$0x1]
  %v305 = vld [vmem:[%s1 + $0x136] sm:$0x1]
  %v306 = vsel %vm102, %v303, 0.0
  %307 = vadd.xlane.f32.xlu0 %v306
  %v308 = vpop.xlane.xlu0 %307
  %v309 = vmul.f32 %v308, %v106
  %v310 = vmul.f32 %v303, %v303
  %v311 = vsel %vm102, %v310, 0.0
  %312 = vadd.xlane.f32.xlu0 %v311
  %v313 = vpop.xlane.xlu0 %312
  %v314 = vmul.f32 %v313, %v106
  %v315 = vmul.f32 %v309, %v309
  %v316 = vsub.f32 %v314, %v315
  %v317 = vsub.f32 %v303, %v309
  %v318 = vadd.f32 %v316, 1e-05
  %v319 = vrsqrt.pop %v318
  %v320 = vmul.f32 %v317, %v319
  %v321 = vlaneseq
  %v322 = vshrl.u32 %v321, 7
  %v323 = vsub.s32 0, %v322
  %v324 = vrot.slane %v304, %v323
  %v325 = vmul.f32 %v320, %v324
  %v326 = vlaneseq
  %v327 = vshrl.u32 %v326, 7
  %v328 = vsub.s32 0, %v327
  %v329 = vrot.slane %v305, %v328
  %v330 = vadd.f32 %v325, %v329
  %v331 = vld [vmem:[%s1 + $0x10] sm:$0xff]
  %v332 = vld [vmem:[%s1 + $0x18] sm:$0xff]
  %v333 = vld [vmem:[%s1 + $0x20] sm:$0xff]
  %v334 = vld [vmem:[%s1 + $0x28] sm:$0xff]
  %v335 = vld [vmem:[%s1 + $0x131] sm:$0x1]
  %v336 = vlaneseq
  %v337 = vshrl.u32 %v336, 7
  %v338 = vsub.s32 0, %v337
  %v339 = vrot.slane %v335, %v338
  %v341 = vsel %vm102, %v330, 0
  %343 = vmatprep.subr.mxu0 0.0
  %344 = vmatpush1.msra.mxu0 0.0
  %345 = vmatprep.subr.mxu0 0.0
  %346 = vmatpush1.msra.mxu0 0.0
  %347 = vmatprep.subr.mxu0 0.0
  %348 = vmatpush1.msra.mxu0 0.0
  %349 = vmatprep.subr.mxu0 0.0
  %350 = vmatpush1.msra.mxu0 0.0
  %351 = vmatprep.subr.mxu0 0.0
  %352 = vmatpush1.msra.mxu0 0.0
  %353 = vmatprep.subr.mxu0 0.0
  %354 = vmatpush1.msra.mxu0 0.0
  %355 = vmatprep.subr.mxu0 0.0
  %356 = vmatpush1.msra.mxu0 0.0
  %357 = vmatprep.subr.mxu0 0.0
  %358 = vmatpush1.msra.mxu0 0.0
  %359 = vmatprep.subr.mxu0 0.0
  %360 = vmatpush1.msra.mxu0 0.0
  %361 = vmatprep.subr.mxu0 0.0
  %362 = vmatpush1.msra.mxu0 0.0
  %363 = vmatprep.subr.mxu0 0.0
  %364 = vmatpush1.msra.mxu0 0.0
  %365 = vmatprep.subr.mxu0 0.0
  %366 = vmatpush1.msra.mxu0 0.0
  %367 = vmatprep.subr.mxu0 0.0
  %368 = vmatpush1.msra.mxu0 %v334
  %369 = vmatprep.subr.mxu0 0.0
  %370 = vmatpush1.msra.mxu0 %v333
  %371 = vmatprep.subr.mxu0 0.0
  %372 = vmatpush1.msra.mxu0 %v332
  %373 = vmatprep.subr.mxu0 0.0
  %374 = vmatpush1.msra.mxu0 %v331
  %375 = vmatprep.subr.mxu0 0.0
  %376 = vmatpush2.msra.mxu0 0.0
  %377 = vmatprep.subr.mxu0 0.0
  %378 = vmatpush2.msra.mxu0 0.0
  %379 = vmatprep.subr.mxu0 0.0
  %380 = vmatpush2.msra.mxu0 0.0
  %381 = vmatprep.subr.mxu0 0.0
  %382 = vmatpush2.msra.mxu0 0.0
  %383 = vmatprep.subr.mxu0 0.0
  %384 = vmatpush2.msra.mxu0 0.0
  %385 = vmatprep.subr.mxu0 0.0
  %386 = vmatpush2.msra.mxu0 0.0
  %387 = vmatprep.subr.mxu0 0.0
  %388 = vmatpush2.msra.mxu0 0.0
  %389 = vmatprep.subr.mxu0 0.0
  %390 = vmatpush2.msra.mxu0 0.0
  %391 = vmatprep.subr.mxu0 0.0
  %392 = vmatpush2.msra.mxu0 0.0
  %393 = vmatprep.subr.mxu0 0.0
  %394 = vmatpush2.msra.mxu0 0.0
  %395 = vmatprep.subr.mxu0 0.0
  %396 = vmatpush2.msra.mxu0 0.0
  %397 = vmatprep.subr.mxu0 0.0
  %398 = vmatpush2.msra.mxu0 0.0
  %399 = vmatprep.subr.mxu0 0.0
  %400 = vmatpush2.msra.mxu0 0.0
  %401 = vmatprep.subr.mxu0 0.0
  %402 = vmatpush2.msra.mxu0 0.0
  %403 = vmatprep.subr.mxu0 0.0
  %404 = vmatpush2.msra.mxu0 0.0
  %405 = vmatprep.subr.mxu0 0.0
  %406 = vmatpush2.msra.mxu0 0.0
  %407 = vmatprep.mubr.f32.mxu0 0.0
  %408 = vmatmul.mubr.f32.gmra.mxu0 %v341
  %v409 = vpop.f32.mrf.mxu0
  %v410 = vadd.f32 %v339, %v409
  %v411 = vpop.f32.mrf.mxu0
  %412 = vdwg.mxu0
  %v413 = vld [vmem:[%s1 + $0x138] sm:$0x1]
  %v414 = vld [vmem:[%s1 + $0x139] sm:$0x1]
  %v415 = vsel %vm102, %v410, 0.0
  %416 = vadd.xlane.f32.xlu0 %v415
  %v417 = vpop.xlane.xlu0 %416
  %v418 = vmul.f32 %v417, %v106
  %v419 = vmul.f32 %v410, %v410
  %v420 = vsel %vm102, %v419, 0.0
  %421 = vadd.xlane.f32.xlu0 %v420
  %v422 = vpop.xlane.xlu0 %421
  %v423 = vmul.f32 %v422, %v106
  %v424 = vmul.f32 %v418, %v418
  %v425 = vsub.f32 %v423, %v424
  %v426 = vsub.f32 %v410, %v418
  %v427 = vadd.f32 %v425, 1e-05
  %v428 = vrsqrt.pop %v427
  %v429 = vmul.f32 %v426, %v428
  %v430 = vlaneseq
  %v431 = vshrl.u32 %v430, 7
  %v432 = vsub.s32 0, %v431
  %v433 = vrot.slane %v413, %v432
  %v434 = vmul.f32 %v429, %v433
  %v435 = vlaneseq
  %v436 = vshrl.u32 %v435, 7
  %v437 = vsub.s32 0, %v436
  %v438 = vrot.slane %v414, %v437
  %v439 = vadd.f32 %v434, %v438
  %v440 = vld [vmem:[%s2 + $0x20] sm:$0xff]
  %v441 = vld [vmem:[%s2 + $0x28] sm:$0xff]
  %v442 = vld [vmem:[%s2 + $0x30] sm:$0xff]
  %v443 = vld [vmem:[%s2 + $0x38] sm:$0xff]
  %v444 = vld [vmem:[%s2 + $0x41] sm:$0x1]
  %v445 = vlaneseq
  %v446 = vshrl.u32 %v445, 7
  %v447 = vsub.s32 0, %v446
  %v448 = vrot.slane %v444, %v447
  %v450 = vsel %vm102, %v439, 0
  %452 = vmatprep.subr.mxu0 0.0
  %453 = vmatpush1.msra.mxu0 0.0
  %454 = vmatprep.subr.mxu0 0.0
  %455 = vmatpush1.msra.mxu0 0.0
  %456 = vmatprep.subr.mxu0 0.0
  %457 = vmatpush1.msra.mxu0 0.0
  %458 = vmatprep.subr.mxu0 0.0
  %459 = vmatpush1.msra.mxu0 0.0
  %460 = vmatprep.subr.mxu0 0.0
  %461 = vmatpush1.msra.mxu0 0.0
  %462 = vmatprep.subr.mxu0 0.0
  %463 = vmatpush1.msra.mxu0 0.0
  %464 = vmatprep.subr.mxu0 0.0
  %465 = vmatpush1.msra.mxu0 0.0
  %466 = vmatprep.subr.mxu0 0.0
  %467 = vmatpush1.msra.mxu0 0.0
  %468 = vmatprep.subr.mxu0 0.0
  %469 = vmatpush1.msra.mxu0 0.0
  %470 = vmatprep.subr.mxu0 0.0
  %471 = vmatpush1.msra.mxu0 0.0
  %472 = vmatprep.subr.mxu0 0.0
  %473 = vmatpush1.msra.mxu0 0.0
  %474 = vmatprep.subr.mxu0 0.0
  %475 = vmatpush1.msra.mxu0 0.0
  %476 = vmatprep.subr.mxu0 0.0
  %477 = vmatpush1.msra.mxu0 %v443
  %478 = vmatprep.subr.mxu0 0.0
  %479 = vmatpush1.msra.mxu0 %v442
  %480 = vmatprep.subr.mxu0 0.0
  %481 = vmatpush1.msra.mxu0 %v441
  %482 = vmatprep.subr.mxu0 0.0
  %483 = vmatpush1.msra.mxu0 %v440
  %484 = vmatprep.subr.mxu0 0.0
  %485 = vmatpush2.msra.mxu0 0.0
  %486 = vmatprep.subr.mxu0 0.0
  %487 = vmatpush2.msra.mxu0 0.0
  %488 = vmatprep.subr.mxu0 0.0
  %489 = vmatpush2.msra.mxu0 0.0
  %490 = vmatprep.subr.mxu0 0.0
  %491 = vmatpush2.msra.mxu0 0.0
  %492 = vmatprep.subr.mxu0 0.0
  %493 = vmatpush2.msra.mxu0 0.0
  %494 = vmatprep.subr.mxu0 0.0
  %495 = vmatpush2.msra.mxu0 0.0
  %496 = vmatprep.subr.mxu0 0.0
  %497 = vmatpush2.msra.mxu0 0.0
  %498 = vmatprep.subr.mxu0 0.0
  %499 = vmatpush2.msra.mxu0 0.0
  %500 = vmatprep.subr.mxu0 0.0
  %501 = vmatpush2.msra.mxu0 0.0
  %502 = vmatprep.subr.mxu0 0.0
  %503 = vmatpush2.msra.mxu0 0.0
  %504 = vmatprep.subr.mxu0 0.0
  %505 = vmatpush2.msra.mxu0 0.0
  %506 = vmatprep.subr.mxu0 0.0
  %507 = vmatpush2.msra.mxu0 0.0
  %508 = vmatprep.subr.mxu0 0.0
  %509 = vmatpush2.msra.mxu0 0.0
  %510 = vmatprep.subr.mxu0 0.0
  %511 = vmatpush2.msra.mxu0 0.0
  %512 = vmatprep.subr.mxu0 0.0
  %513 = vmatpush2.msra.mxu0 0.0
  %514 = vmatprep.subr.mxu0 0.0
  %515 = vmatpush2.msra.mxu0 0.0
  %516 = vmatprep.mubr.f32.mxu0 0.0
  %517 = vmatmul.mubr.f32.gmra.mxu0 %v450
  %v518 = vpop.f32.mrf.mxu0
  %v519 = vadd.f32 %v448, %v518
  %v520 = vpop.f32.mrf.mxu0
  %521 = vdwg.mxu0
  %v522 = vmax.f32 %v519, 0.0
  %v523 = vld [vmem:[%s1 + $0xb0] sm:$0xff]
  %v524 = vld [vmem:[%s1 + $0xb8] sm:$0xff]
  %v525 = vld [vmem:[%s1 + $0xc0] sm:$0xff]
  %v526 = vld [vmem:[%s1 + $0xc8] sm:$0xff]
  %v527 = vld [vmem:[%s1 + $0xd0] sm:$0xff]
  %v528 = vld [vmem:[%s1 + $0xd8] sm:$0xff]
  %v529 = vld [vmem:[%s1 + $0xe0] sm:$0xff]
  %v530 = vld [vmem:[%s1 + $0xe8] sm:$0xff]
  %v531 = vld [vmem:[%s1 + $0xf0] sm:$0xff]
  %v532 = vld [vmem:[%s1 + $0xf8] sm:$0xff]
  %v533 = vld [vmem:[%s1 + $0x100] sm:$0xff]
  %v534 = vld [vmem:[%s1 + $0x108] sm:$0xff]
  %v535 = vld [vmem:[%s1 + $0x110] sm:$0xff]
  %v536 = vld [vmem:[%s1 + $0x118] sm:$0xff]
  %v537 = vld [vmem:[%s1 + $0x120] sm:$0xff]
  %v538 = vld [vmem:[%s1 + $0x128] sm:$0xff]
  %v539 = vld [vmem:[%s1 + $0x137] sm:$0x1]
  %v540 = vlaneseq
  %v541 = vshrl.u32 %v540, 7
  %v542 = vsub.s32 0, %v541
  %v543 = vrot.slane %v539, %v542
  %544 = vmatprep.subr.mxu0 0.0
  %545 = vmatpush1.msra.mxu0 %v538
  %546 = vmatprep.subr.mxu0 0.0
  %547 = vmatpush1.msra.mxu0 %v537
  %548 = vmatprep.subr.mxu0 0.0
  %549 = vmatpush1.msra.mxu0 %v536
  %550 = vmatprep.subr.mxu0 0.0
  %551 = vmatpush1.msra.mxu0 %v535
  %552 = vmatprep.subr.mxu0 0.0
  %553 = vmatpush1.msra.mxu0 %v534
  %554 = vmatprep.subr.mxu0 0.0
  %555 = vmatpush1.msra.mxu0 %v533
  %556 = vmatprep.subr.mxu0 0.0
  %557 = vmatpush1.msra.mxu0 %v532
  %558 = vmatprep.subr.mxu0 0.0
  %559 = vmatpush1.msra.mxu0 %v531
  %560 = vmatprep.subr.mxu0 0.0
  %561 = vmatpush1.msra.mxu0 %v530
  %562 = vmatprep.subr.mxu0 0.0
  %563 = vmatpush1.msra.mxu0 %v529
  %564 = vmatprep.subr.mxu0 0.0
  %565 = vmatpush1.msra.mxu0 %v528
  %566 = vmatprep.subr.mxu0 0.0
  %567 = vmatpush1.msra.mxu0 %v527
  %568 = vmatprep.subr.mxu0 0.0
  %569 = vmatpush1.msra.mxu0 %v526
  %570 = vmatprep.subr.mxu0 0.0
  %571 = vmatpush1.msra.mxu0 %v525
  %572 = vmatprep.subr.mxu0 0.0
  %573 = vmatpush1.msra.mxu0 %v524
  %574 = vmatprep.subr.mxu0 0.0
  %575 = vmatpush1.msra.mxu0 %v523
  %576 = vmatprep.subr.mxu0 0.0
  %577 = vmatpush2.msra.mxu0 0.0
  %578 = vmatprep.subr.mxu0 0.0
  %579 = vmatpush2.msra.mxu0 0.0
  %580 = vmatprep.subr.mxu0 0.0
  %581 = vmatpush2.msra.mxu0 0.0
  %582 = vmatprep.subr.mxu0 0.0
  %583 = vmatpush2.msra.mxu0 0.0
  %584 = vmatprep.subr.mxu0 0.0
  %585 = vmatpush2.msra.mxu0 0.0
  %586 = vmatprep.subr.mxu0 0.0
  %587 = vmatpush2.msra.mxu0 0.0
  %588 = vmatprep.subr.mxu0 0.0
  %589 = vmatpush2.msra.mxu0 0.0
  %590 = vmatprep.subr.mxu0 0.0
  %591 = vmatpush2.msra.mxu0 0.0
  %592 = vmatprep.subr.mxu0 0.0
  %593 = vmatpush2.msra.mxu0 0.0
  %594 = vmatprep.subr.mxu0 0.0
  %595 = vmatpush2.msra.mxu0 0.0
  %596 = vmatprep.subr.mxu0 0.0
  %597 = vmatpush2.msra.mxu0 0.0
  %598 = vmatprep.subr.mxu0 0.0
  %599 = vmatpush2.msra.mxu0 0.0
  %600 = vmatprep.subr.mxu0 0.0
  %601 = vmatpush2.msra.mxu0 0.0
  %602 = vmatprep.subr.mxu0 0.0
  %603 = vmatpush2.msra.mxu0 0.0
  %604 = vmatprep.subr.mxu0 0.0
  %605 = vmatpush2.msra.mxu0 0.0
  %606 = vmatprep.subr.mxu0 0.0
  %607 = vmatpush2.msra.mxu0 0.0
  %608 = vmatprep.mubr.f32.mxu0 0.0
  %609 = vmatmul.mubr.f32.gmra.mxu0 %v522
  %v610 = vpop.f32.mrf.mxu0
  %v611 = vadd.f32 %v543, %v610
  %v612 = vpop.f32.mrf.mxu0
  %613 = vdwg.mxu0
  %v614 = vadd.f32 %v439, %v611
  %v615 = vld [vmem:[%s1 + $0x13a] sm:$0x1]
  %v616 = vld [vmem:[%s1 + $0x13b] sm:$0x1]
  %v617 = vsel %vm102, %v614, 0.0
  %618 = vadd.xlane.f32.xlu0 %v617
  %v619 = vpop.xlane.xlu0 %618
  %v620 = vmul.f32 %v619, %v106
  %v621 = vmul.f32 %v614, %v614
  %v622 = vsel %vm102, %v621, 0.0
  %623 = vadd.xlane.f32.xlu0 %v622
  %v624 = vpop.xlane.xlu0 %623
  %v625 = vmul.f32 %v624, %v106
  %v626 = vmul.f32 %v620, %v620
  %v627 = vsub.f32 %v625, %v626
  %v628 = vsub.f32 %v614, %v620
  %v629 = vadd.f32 %v627, 1e-05
  %v630 = vrsqrt.pop %v629
  %v631 = vmul.f32 %v628, %v630
  %v632 = vlaneseq
  %v633 = vshrl.u32 %v632, 7
  %v634 = vsub.s32 0, %v633
  %v635 = vrot.slane %v615, %v634
  %v636 = vmul.f32 %v631, %v635
  %v637 = vlaneseq
  %v638 = vshrl.u32 %v637, 7
  %v639 = vsub.s32 0, %v638
  %v640 = vrot.slane %v616, %v639
  %v641 = vadd.f32 %v636, %v640
  %v642 = vld [vmem:[%s1 + $0x13c] sm:$0x1]
  %v643 = vlaneseq
  %v644 = vshrl.u32 %v643, 7
  %v645 = vsub.s32 0, %v644
  %v646 = vrot.slane %v642, %v645
  %v647 = vmul.f32 %v641, %v646
  %v648 = vsel %vm102, %v647, 0.0
  %649 = vadd.xlane.f32.xlu0 %v648
  %v650 = vpop.xlane.xlu0 %649
  %s651 = sld [smem:[#allocation2]]
  %v652 = vstv %s651
  %v653 = vadd.f32 %v650, %v652
  %654 = vst [vmem:[%s4] sm:$0xff] %v653
  // Predicated region
  $region18: #{forward.1} parent=0 // pred_check
    _
  $region19: #{forward.1} parent=0 // pred_check_branch
    %656 = sbr.rel (0) target = $region21
  $region20: #{forward.1} parent=0 // pred_region
    _
  $region21: #{forward.1} parent=0 // pred_fallthru
    _
  // Predicated region
  $region22: #{forward.1} parent=0 // pred_check
    _
  $region23: #{forward.1} parent=0 // pred_check_branch
    %658 = sbr.rel (0) target = $region25
  $region24: #{forward.1} parent=0 // pred_region
    _
  $region25: #{forward.1} parent=0 // pred_fallthru
    _

</llo_original>
